<compile_context>
chip_gen: v7x
topology: tpu7x:2x2x1
jax: 0.10.0
libtpu: 0.0.40
codegen_flags: <defaults>
</compile_context>

<pallas_src>
import functools

import jax
import jax.numpy as jnp
from jax import lax
from jax.experimental import pallas as pl
from jax.experimental.pallas import tpu as pltpu

LANES = 128            # batch tiles are multiples of the 128-lane vreg width so the
                       # transposed [P, TB] output stores stay unmasked / lane-dense.
MAX_BATCH_TILE = 4096  # rows per grid step (upper bound).
VMEM_BUDGET = 8 * 1024 * 1024  # conservative double-buffer budget (fits v7x's 32 MiB).


def _round_up(x, m):
    return ((x + m - 1) // m) * m


def _choose_batch_tile(batch, row_bytes):
    """Batch tile: multiple of 128, VMEM-budget capped, >=2 grid steps when B > 128."""
    tb = VMEM_BUDGET // max(row_bytes, 1)
    tb = max(LANES, (tb // LANES) * LANES)
    tb = min(tb, MAX_BATCH_TILE)
    if batch > LANES:
        # v7x megacore: keep at least two grid steps so both TensorCores get work.
        tb = min(tb, _round_up((batch + 1) // 2, LANES))
    tb = min(tb, _round_up(max(batch, 1), LANES))
    return tb


def _log_softmax_cols(logits):
    """Numerically-stable log-softmax over axis 0 (the program / sublane axis)."""
    m = jnp.max(logits, axis=0, keepdims=True)
    shifted = logits - m
    lse = jnp.log(jnp.sum(jnp.exp(shifted), axis=0, keepdims=True))
    return shifted - lse


def _prior_kernel(x_ref, w_ref, b_ref, dist_ref, logits_ref):
    """One batch tile: W[P,L] . X[TB,L]^T + b -> transposed logits [P, TB]."""
    # Contract the feature axis directly (== A @ B.T on the MXU); no in-kernel
    # transpose and the output stays lane-dense along the batch axis.
    logits = lax.dot_general(
        w_ref[...], x_ref[...],
        dimension_numbers=(((1,), (1,)), ((), ())),
        preferred_element_type=jnp.float32) + b_ref[...]
    # Columns belonging to padding rows of a partial batch tile hold garbage; Pallas
    # discards them on the partial writeback, so do NOT "fix" this with masked stores.
    dist_ref[...] = _log_softmax_cols(logits)
    logits_ref[...] = logits


def _posterior_kernel(x1_ref, x2_ref, w1_ref, w2_ref, b_ref, dist_ref, logits_ref):
    """Posterior path: the [series, feats] concat is fused as a split matmul."""
    logits = (lax.dot_general(w1_ref[...], x1_ref[...],
                              dimension_numbers=(((1,), (1,)), ((), ())),
                              preferred_element_type=jnp.float32)
              + lax.dot_general(w2_ref[...], x2_ref[...],
                                dimension_numbers=(((1,), (1,)), ((), ())),
                                preferred_element_type=jnp.float32)
              + b_ref[...])
    dist_ref[...] = _log_softmax_cols(logits)
    logits_ref[...] = logits


@functools.partial(jax.jit, static_argnames=("input_dtype",))
def simple_prior_forward(series, weight, bias, input_dtype=jnp.float32):
    """series: [B, L], weight: [P, L] (PyTorch Linear layout), bias: [P] -> [B, P]."""
    series = series.astype(input_dtype)
    weight = weight.astype(input_dtype)
    bias_col = bias.astype(jnp.float32).reshape(-1, 1)
    B, L = series.shape
    P = weight.shape[0]

    in_bytes = jnp.dtype(input_dtype).itemsize
    row_bytes = 2 * (L * in_bytes + 2 * P * 4)   # 2x for double buffering
    TB = _choose_batch_tile(B, row_bytes)
    grid = (pl.cdiv(B, TB),)

    cost = pl.CostEstimate(
        flops=2 * B * L * P,
        transcendentals=B * P,
        bytes_accessed=in_bytes * (B * L + P * L) + 4 * (P + 2 * B * P),
    )

    dist_t, logits_t = pl.pallas_call(
        _prior_kernel,
        out_shape=(
            jax.ShapeDtypeStruct((P, B), jnp.float32),
            jax.ShapeDtypeStruct((P, B), jnp.float32),
        ),
        grid=grid,
        in_specs=[
            pl.BlockSpec((TB, L), lambda i: (i, 0)),   # batch-tiled input
            pl.BlockSpec((P, L), lambda i: (0, 0)),    # weight stays resident
            pl.BlockSpec((P, 1), lambda i: (0, 0)),    # bias stays resident
        ],
        out_specs=(
            pl.BlockSpec((P, TB), lambda i: (0, i)),   # unpadded, lane-dense in batch
            pl.BlockSpec((P, TB), lambda i: (0, i)),
        ),
        compiler_params=pltpu.CompilerParams(dimension_semantics=("parallel",)),
        cost_estimate=cost,
    )(series, weight, bias_col)

    # Back to the module's [B, P] layout (tiny wrapper-side transpose).
    return {"dist_programs": dist_t.T, "logits": logits_t.T}


@functools.partial(jax.jit, static_argnames=("input_dtype",))
def simple_posterior_forward(series, posterior_addition_feats, weight, bias,
                             input_dtype=jnp.float32):
    """typ='simple_posterior': weight is [P, L+F]; the concat is fused in-kernel."""
    series = series.astype(input_dtype)
    feats = posterior_addition_feats.astype(input_dtype)
    B, L = series.shape
    F = feats.shape[1]
    P = weight.shape[0]

    w1 = weight[:, :L].astype(input_dtype)
    w2 = weight[:, L:].astype(input_dtype)
    bias_col = bias.astype(jnp.float32).reshape(-1, 1)

    in_bytes = jnp.dtype(input_dtype).itemsize
    row_bytes = 2 * ((L + F) * in_bytes + 2 * P * 4)
    TB = _choose_batch_tile(B, row_bytes)
    grid = (pl.cdiv(B, TB),)

    cost = pl.CostEstimate(
        flops=2 * B * (L + F) * P,
        transcendentals=B * P,
        bytes_accessed=in_bytes * (B * (L + F) + P * (L + F)) + 4 * (P + 2 * B * P),
    )

    dist_t, logits_t = pl.pallas_call(
        _posterior_kernel,
        out_shape=(
            jax.ShapeDtypeStruct((P, B), jnp.float32),
            jax.ShapeDtypeStruct((P, B), jnp.float32),
        ),
        grid=grid,
        in_specs=[
            pl.BlockSpec((TB, L), lambda i: (i, 0)),
            pl.BlockSpec((TB, F), lambda i: (i, 0)),
            pl.BlockSpec((P, L), lambda i: (0, 0)),
            pl.BlockSpec((P, F), lambda i: (0, 0)),
            pl.BlockSpec((P, 1), lambda i: (0, 0)),
        ],
        out_specs=(
            pl.BlockSpec((P, TB), lambda i: (0, i)),
            pl.BlockSpec((P, TB), lambda i: (0, i)),
        ),
        compiler_params=pltpu.CompilerParams(dimension_semantics=("parallel",)),
        cost_estimate=cost,
    )(series, feats, w1, w2, bias_col)

    return {"dist_programs": dist_t.T, "logits": logits_t.T}


if __name__ == "__main__":
    # Small shapes consistent with the module.
    batch = 2
    series_length = 16
    num_programs = 8
    embedding_dim = 5           # program_embedding: [num_programs, embedding_dim] (unused in forward)
    posterior_addition_dim = 4

    key = jax.random.PRNGKey(0)
    k_series, k_w, k_b, k_emb, k_post, k_wp, k_bp = jax.random.split(key, 7)

    # Deterministic parameter init (PyTorch Linear-style uniform bounds).
    bound = 1.0 / jnp.sqrt(series_length)
    weight = jax.random.uniform(
        k_w, (num_programs, series_length), minval=-bound, maxval=bound, dtype=jnp.float32
    )  # PyTorch layout [out, in]
    bias = jax.random.uniform(
        k_b, (num_programs,), minval=-bound, maxval=bound, dtype=jnp.float32
    )
    program_embedding = jax.random.normal(
        k_emb, (num_programs, embedding_dim), dtype=jnp.float32
    )  # defined for completeness; not used in forward

    series = jax.random.normal(k_series, (batch, series_length), dtype=jnp.float32)

    # --- simpleprior path (f32) ---
    out = simple_prior_forward(series, weight, bias)
    jax.block_until_ready(out)

    ref_logits = series @ weight.T + bias
    ref_dist = jax.nn.log_softmax(ref_logits, axis=1)
    assert out["logits"].shape == (batch, num_programs)
    assert out["dist_programs"].shape == (batch, num_programs)
    assert jnp.allclose(out["logits"], ref_logits, atol=1e-5, rtol=1e-5)
    assert jnp.allclose(out["dist_programs"], ref_dist, atol=1e-5, rtol=1e-5)

    # --- simpleprior path (bf16 inputs/weights, f32 accumulation): loose tolerance ---
    out_bf16 = simple_prior_forward(series, weight, bias, input_dtype=jnp.bfloat16)
    jax.block_until_ready(out_bf16)
    assert jnp.allclose(out_bf16["logits"], ref_logits, atol=0.1, rtol=0.1)
    assert jnp.allclose(out_bf16["dist_programs"], ref_dist, atol=0.1, rtol=0.1)

    # --- simple_posterior path (concat fused in-kernel) ---
    post_feats = jax.random.normal(
        k_post, (batch, posterior_addition_dim), dtype=jnp.float32
    )
    bound_p = 1.0 / jnp.sqrt(series_length + posterior_addition_dim)
    weight_p = jax.random.uniform(
        k_wp, (num_programs, series_length + posterior_addition_dim),
        minval=-bound_p, maxval=bound_p, dtype=jnp.float32
    )
    bias_p = jax.random.uniform(
        k_bp, (num_programs,), minval=-bound_p, maxval=bound_p, dtype=jnp.float32
    )
    out_p = simple_posterior_forward(series, post_feats, weight_p, bias_p)
    jax.block_until_ready(out_p)

    inp_cat = jnp.concatenate([series, post_feats], axis=1)
    ref_logits_p = inp_cat @ weight_p.T + bias_p
    ref_dist_p = jax.nn.log_softmax(ref_logits_p, axis=1)
    assert jnp.allclose(out_p["logits"], ref_logits_p, atol=1e-5, rtol=1e-5)
    assert jnp.allclose(out_p["dist_programs"], ref_dist_p, atol=1e-5, rtol=1e-5)

    print("KERNEL_OK")
</pallas_src>

<mosaic_0001>
module attributes {stable_mosaic.version = 11 : i64} {
  func.func @_prior_kernel(%arg0: i32, %arg1: memref<128x16xf32, #tpu.memory_space<vmem>>, %arg2: memref<8x16xf32, #tpu.memory_space<vmem>>, %arg3: memref<8x1xf32, #tpu.memory_space<vmem>>, %arg4: memref<8x128xf32, #tpu.memory_space<vmem>>, %arg5: memref<8x128xf32, #tpu.memory_space<vmem>>) attributes {dimension_semantics = [#tpu.dimension_semantics<parallel>], iteration_bounds = array<i64: 1>, scalar_prefetch = 0 : i64, scratch_operands = 0 : i64, tpu.core_type = #tpu.core_type<tc>, window_params = [{transform_indices = @transform_0, window_bounds = array<i64: 128, 16>}, {pipeline_mode = #tpu.pipeline_mode<synchronous>, transform_indices = @transform_1, window_bounds = array<i64: 8, 16>}, {pipeline_mode = #tpu.pipeline_mode<synchronous>, transform_indices = @transform_2, window_bounds = array<i64: 8, 1>}, {transform_indices = @transform_3, window_bounds = array<i64: 8, 128>}, {transform_indices = @transform_4, window_bounds = array<i64: 8, 128>}]} {
    %c0 = arith.constant 0 : index
    %c0_0 = arith.constant 0 : index
    %0 = vector.load %arg2[%c0, %c0_0] : memref<8x16xf32, #tpu.memory_space<vmem>>, vector<8x16xf32>
    %c0_1 = arith.constant 0 : index
    %c0_2 = arith.constant 0 : index
    %1 = vector.load %arg1[%c0_1, %c0_2] : memref<128x16xf32, #tpu.memory_space<vmem>>, vector<128x16xf32>
    %cst = arith.constant dense<0.000000e+00> : vector<8x128xf32>
    %2 = tpu.matmul %0, %1, %cst {dimension_numbers = #tpu.dot_dimension_numbers<[1], [1], [0], [0], [0, 0, 1, 0], [], []>} : vector<8x16xf32>, vector<128x16xf32>, vector<8x128xf32> -> vector<8x128xf32>
    %c0_3 = arith.constant 0 : index
    %c0_4 = arith.constant 0 : index
    %3 = vector.load %arg3[%c0_3, %c0_4] : memref<8x1xf32, #tpu.memory_space<vmem>>, vector<8x1xf32>
    %4 = vector.broadcast %3 : vector<8x1xf32> to vector<8x128xf32>
    %5 = arith.addf %2, %4 : vector<8x128xf32>
    %cst_5 = arith.constant dense<0xFF800000> : vector<128xf32>
    %6 = vector.multi_reduction <maximumf>, %5, %cst_5 [0] : vector<8x128xf32> to vector<128xf32>
    %7 = vector.shape_cast %6 : vector<128xf32> to vector<1x128xf32>
    %8 = vector.broadcast %7 : vector<1x128xf32> to vector<8x128xf32>
    %9 = arith.subf %5, %8 : vector<8x128xf32>
    %10 = math.exp %9 : vector<8x128xf32>
    %cst_6 = arith.constant dense<0.000000e+00> : vector<128xf32>
    %11 = vector.multi_reduction <add>, %10, %cst_6 [0] : vector<8x128xf32> to vector<128xf32>
    %12 = vector.shape_cast %11 : vector<128xf32> to vector<1x128xf32>
    %13 = math.log %12 : vector<1x128xf32>
    %14 = vector.broadcast %13 : vector<1x128xf32> to vector<8x128xf32>
    %15 = arith.subf %9, %14 : vector<8x128xf32>
    %c0_7 = arith.constant 0 : index
    %c0_8 = arith.constant 0 : index
    %16 = vector.load %arg4[%c0_7, %c0_8] : memref<8x128xf32, #tpu.memory_space<vmem>>, vector<8x128xf32>
    tpu.vector_store %arg4[%c0_7, %c0_8], %15 {strides = array<i32>} : memref<8x128xf32, #tpu.memory_space<vmem>>, vector<8x128xf32>,
    %c0_9 = arith.constant 0 : index
    %c0_10 = arith.constant 0 : index
    %17 = vector.load %arg5[%c0_9, %c0_10] : memref<8x128xf32, #tpu.memory_space<vmem>>, vector<8x128xf32>
    tpu.vector_store %arg5[%c0_9, %c0_10], %5 {strides = array<i32>} : memref<8x128xf32, #tpu.memory_space<vmem>>, vector<8x128xf32>,
    return
  }
  func.func @transform_0(%arg0: i32) -> (i32, i32) {
    %c0_i32 = arith.constant 0 : i32
    %c0_i32_0 = arith.constant 0 : i32
    return %arg0, %c0_i32 : i32, i32
  }
  func.func @transform_1(%arg0: i32) -> (i32, i32) {
    %c0_i32 = arith.constant 0 : i32
    %c0_i32_0 = arith.constant 0 : i32
    %c0_i32_1 = arith.constant 0 : i32
    return %c0_i32, %c0_i32_0 : i32, i32
  }
  func.func @transform_2(%arg0: i32) -> (i32, i32) {
    %c0_i32 = arith.constant 0 : i32
    %c0_i32_0 = arith.constant 0 : i32
    %c0_i32_1 = arith.constant 0 : i32
    return %c0_i32, %c0_i32_0 : i32, i32
  }
  func.func @transform_3(%arg0: i32) -> (i32, i32) {
    %c0_i32 = arith.constant 0 : i32
    %c0_i32_0 = arith.constant 0 : i32
    return %c0_i32, %arg0 : i32, i32
  }
  func.func @transform_4(%arg0: i32) -> (i32, i32) {
    %c0_i32 = arith.constant 0 : i32
    %c0_i32_0 = arith.constant 0 : i32
    return %c0_i32, %arg0 : i32, i32
  }
}

</mosaic_0001>

<llo_original>
// kernel: simple_prior_forward.1
$region0: #{simple_prior_forward.1}
  #allocation0 [shape = 'u32[]', space=smem, size = 0x4, offset = 0x4, fixed_abs, tag = 'smem constant byte address 0x4 - core index']
  #allocation1 [shape = 'u32[144,128]{1,0:T(1,128)}', space=vmem, size = 0x12000, scoped, tag = 'internal scratch']
  %s0 = inlined_call_operand.vmem [shape: f32[2,16], index: 0, kind: input, shape index: {}]
  %s1 = inlined_call_operand.vmem [shape: f32[8,16], index: 1, kind: input, shape index: {}]
  %s2 = inlined_call_operand.vmem [shape: f32[8,1], index: 2, kind: input, shape index: {}]
  %s3 = inlined_call_operand.vmem [shape: f32[8,2], index: 3, kind: output, shape index: {0}]
  %s4 = inlined_call_operand.vmem [shape: f32[8,2], index: 4, kind: output, shape index: {1}]
  %5 = xla_tuple %s3, %s4
  %s6 = sld [smem:[#allocation0]]
  $region30: #{simple_prior_forward.1} parent=0
    _
  %s8 = ssub.s32 1, %s6
  %s9 = scalar_select 0, %s8, %s6
  // Predicated region
  $region2: #{simple_prior_forward.1} parent=0 // pred_check
    _
  $region3: #{simple_prior_forward.1} parent=0 // pred_check_branch
    %11 = sbr.rel (0) target = $region5
  $region4: #{simple_prior_forward.1} parent=0 // pred_region
    _
  $region5: #{simple_prior_forward.1} parent=0 // pred_fallthru
    _
  // Predicated region
  $region6: #{simple_prior_forward.1} parent=0 // pred_check
    _
  $region7: #{simple_prior_forward.1} parent=0 // pred_check_branch
    %13 = sbr.rel (0) target = $region9
  $region8: #{simple_prior_forward.1} parent=0 // pred_region
    _
  $region9: #{simple_prior_forward.1} parent=0 // pred_fallthru
    _
  // Predicated region
  $region10: #{simple_prior_forward.1} parent=0 // pred_check
    _
  $region11: #{simple_prior_forward.1} parent=0 // pred_check_branch
    %15 = sbr.rel (0) target = $region13
  $region12: #{simple_prior_forward.1} parent=0 // pred_region
    _
  $region13: #{simple_prior_forward.1} parent=0 // pred_fallthru
    _
  %v16 = vld [vmem:[%s1] sm:$0xff]
  %v17 = vld [vmem:[%s0] sm:$0xff]
  %v18 = vld [vmem:[%s0 + $0x8] sm:$0xff]
  %v19 = vld [vmem:[%s0 + $0x10] sm:$0xff]
  %v20 = vld [vmem:[%s0 + $0x18] sm:$0xff]
  %v21 = vld [vmem:[%s0 + $0x20] sm:$0xff]
  %v22 = vld [vmem:[%s0 + $0x28] sm:$0xff]
  %v23 = vld [vmem:[%s0 + $0x30] sm:$0xff]
  %v24 = vld [vmem:[%s0 + $0x38] sm:$0xff]
  %v25 = vld [vmem:[%s0 + $0x40] sm:$0xff]
  %v26 = vld [vmem:[%s0 + $0x48] sm:$0xff]
  %v27 = vld [vmem:[%s0 + $0x50] sm:$0xff]
  %v28 = vld [vmem:[%s0 + $0x58] sm:$0xff]
  %v29 = vld [vmem:[%s0 + $0x60] sm:$0xff]
  %v30 = vld [vmem:[%s0 + $0x68] sm:$0xff]
  %v31 = vld [vmem:[%s0 + $0x70] sm:$0xff]
  %v32 = vld [vmem:[%s0 + $0x78] sm:$0xff]
  %v33 = vld [vmem:[%s2] sm:$0xff]
  %35 = vset.pattern.permute.xlu0 0
  %36 = vperm.xlu0 %35, %v33
  %v37 = vpop.permute.xlu0 %36
  %vm39 = vcmask 130048
  %v41 = vsel %vm39, %v16, 0
  %v44 = vsel %vm39, %v17, 0
  %v47 = vsel %vm39, %v18, 0
  %v50 = vsel %vm39, %v19, 0
  %v53 = vsel %vm39, %v20, 0
  %v56 = vsel %vm39, %v21, 0
  %v59 = vsel %vm39, %v22, 0
  %v62 = vsel %vm39, %v23, 0
  %v65 = vsel %vm39, %v24, 0
  %v68 = vsel %vm39, %v25, 0
  %v71 = vsel %vm39, %v26, 0
  %v74 = vsel %vm39, %v27, 0
  %v77 = vsel %vm39, %v28, 0
  %v80 = vsel %vm39, %v29, 0
  %v83 = vsel %vm39, %v30, 0
  %v86 = vsel %vm39, %v31, 0
  %v89 = vsel %vm39, %v32, 0
  %91 = vmatprep.subr.mxu0 0.0
  %92 = vmatpush1.xpose.msra.mxu0 %v44
  %93 = vmatprep.subr.mxu0 0.0
  %94 = vmatpush1.xpose.msra.mxu0 %v47
  %95 = vmatprep.subr.mxu0 0.0
  %96 = vmatpush1.xpose.msra.mxu0 %v50
  %97 = vmatprep.subr.mxu0 0.0
  %98 = vmatpush1.xpose.msra.mxu0 %v53
  %99 = vmatprep.subr.mxu0 0.0
  %100 = vmatpush1.xpose.msra.mxu0 %v56
  %101 = vmatprep.subr.mxu0 0.0
  %102 = vmatpush1.xpose.msra.mxu0 %v59
  %103 = vmatprep.subr.mxu0 0.0
  %104 = vmatpush1.xpose.msra.mxu0 %v62
  %105 = vmatprep.subr.mxu0 0.0
  %106 = vmatpush1.xpose.msra.mxu0 %v65
  %107 = vmatprep.subr.mxu0 0.0
  %108 = vmatpush1.xpose.msra.mxu0 %v68
  %109 = vmatprep.subr.mxu0 0.0
  %110 = vmatpush1.xpose.msra.mxu0 %v71
  %111 = vmatprep.subr.mxu0 0.0
  %112 = vmatpush1.xpose.msra.mxu0 %v74
  %113 = vmatprep.subr.mxu0 0.0
  %114 = vmatpush1.xpose.msra.mxu0 %v77
  %115 = vmatprep.subr.mxu0 0.0
  %116 = vmatpush1.xpose.msra.mxu0 %v80
  %117 = vmatprep.subr.mxu0 0.0
  %118 = vmatpush1.xpose.msra.mxu0 %v83
  %119 = vmatprep.subr.mxu0 0.0
  %120 = vmatpush1.xpose.msra.mxu0 %v86
  %121 = vmatprep.subr.mxu0 0.0
  %122 = vmatpush1.xpose.msra.mxu0 %v89
  %123 = vmatprep.subr.mxu0 0.0
  %124 = vmatpush1.xpose.msra.mxu0 0.0
  %125 = vmatprep.subr.mxu0 0.0
  %126 = vmatpush1.xpose.msra.mxu0 0.0
  %127 = vmatprep.subr.mxu0 0.0
  %128 = vmatpush1.xpose.msra.mxu0 0.0
  %129 = vmatprep.subr.mxu0 0.0
  %130 = vmatpush1.xpose.msra.mxu0 0.0
  %131 = vmatprep.subr.mxu0 0.0
  %132 = vmatpush1.xpose.msra.mxu0 0.0
  %133 = vmatprep.subr.mxu0 0.0
  %134 = vmatpush1.xpose.msra.mxu0 0.0
  %135 = vmatprep.subr.mxu0 0.0
  %136 = vmatpush1.xpose.msra.mxu0 0.0
  %137 = vmatprep.subr.mxu0 0.0
  %138 = vmatpush1.xpose.msra.mxu0 0.0
  %139 = vmatprep.subr.mxu0 0.0
  %140 = vmatpush1.xpose.msra.mxu0 0.0
  %141 = vmatprep.subr.mxu0 0.0
  %142 = vmatpush1.xpose.msra.mxu0 0.0
  %143 = vmatprep.subr.mxu0 0.0
  %144 = vmatpush1.xpose.msra.mxu0 0.0
  %145 = vmatprep.subr.mxu0 0.0
  %146 = vmatpush1.xpose.msra.mxu0 0.0
  %147 = vmatprep.subr.mxu0 0.0
  %148 = vmatpush1.xpose.msra.mxu0 0.0
  %149 = vmatprep.subr.mxu0 0.0
  %150 = vmatpush1.xpose.msra.mxu0 0.0
  %151 = vmatprep.subr.mxu0 0.0
  %152 = vmatpush1.xpose.msra.mxu0 0.0
  %153 = vmatprep.subr.mxu0 0.0
  %154 = vmatpush1.xpose.msra.mxu0 0.0
  %155 = vmatprep.mubr.f32.mxu0 0.0
  %156 = vmatmul.mubr.f32.gmra.mrb[0].mxu0 %v41
  %v157 = vpop.f32.mrb[0].mxu0
  %v158 = vadd.f32 %v37, %v157
  %v159 = vpop.f32.mrb[0].mxu0
  %160 = vdwg.mxu0
  %v161 = vrot.slane %v158, 4
  %v162 = vmax.f32 %v158, %v161
  %v163 = vrot.slane %v162, 2
  %v164 = vmax.f32 %v162, %v163
  %v165 = vrot.slane %v164, 1
  %v166 = vmax.f32 %v164, %v165
  %v167 = vsub.f32 %v158, %v166
  %v168 = vmul.f32 %v167, 1.442695
  %v169 = vpow.pop %v168
  %v170 = vrot.slane %v169, 4
  %v171 = vadd.f32 %v169, %v170
  %v172 = vrot.slane %v171, 2
  %v173 = vadd.f32 %v171, %v172
  %v174 = vrot.slane %v173, 1
  %v175 = vadd.f32 %v173, %v174
  %v176 = vlog2.pop %v175
  %v177 = vmul.f32 %v176, 0.6931472
  %v178 = vsub.f32 %v167, %v177
  %179 = vst [vmem:[%s3] sm:$0xff] %v178
  %180 = vst [vmem:[%s4] sm:$0xff] %v158
  // Predicated region
  $region14: #{simple_prior_forward.1} parent=0 // pred_check
    _
  $region15: #{simple_prior_forward.1} parent=0 // pred_check_branch
    %182 = sbr.rel (0) target = $region17
  $region16: #{simple_prior_forward.1} parent=0 // pred_region
    _
  $region17: #{simple_prior_forward.1} parent=0 // pred_fallthru
    _
  // Predicated region
  $region18: #{simple_prior_forward.1} parent=0 // pred_check
    _
  $region19: #{simple_prior_forward.1} parent=0 // pred_check_branch
    %184 = sbr.rel (0) target = $region21
  $region20: #{simple_prior_forward.1} parent=0 // pred_region
    _
  $region21: #{simple_prior_forward.1} parent=0 // pred_fallthru
    _
  // Predicated region
  $region22: #{simple_prior_forward.1} parent=0 // pred_check
    _
  $region23: #{simple_prior_forward.1} parent=0 // pred_check_branch
    %186 = sbr.rel (0) target = $region25
  $region24: #{simple_prior_forward.1} parent=0 // pred_region
    _
  $region25: #{simple_prior_forward.1} parent=0 // pred_fallthru
    _
  // Predicated region
  $region26: #{simple_prior_forward.1} parent=0 // pred_check
    _
  $region27: #{simple_prior_forward.1} parent=0 // pred_check_branch
    %188 = sbr.rel (0) target = $region29
  $region28: #{simple_prior_forward.1} parent=0 // pred_region
    _
  $region29: #{simple_prior_forward.1} parent=0 // pred_fallthru
    _

</llo_original>
